<compile_context>
chip_gen: v5e
topology: v5e:2x2
jax: 0.10.0
libtpu: 0.0.40
codegen_flags: <defaults>
</compile_context>

<pallas_src>
import functools
import math

import jax
import jax.numpy as jnp
import numpy as np
from jax import lax
from jax.experimental import pallas as pl
from jax.experimental.pallas import tpu as pltpu


_SQRT_2_OVER_PI = math.sqrt(2.0 / math.pi)


def _gelu(x):
    # GELU (tanh approximation), exactly as the PyTorch module writes it.
    return 0.5 * x * (1.0 + jnp.tanh(_SQRT_2_OVER_PI * (x + 0.044715 * x * x * x)))


def _layernorm(x, g, b, eps):
    mean = jnp.mean(x, axis=-1, keepdims=True)
    xc = x - mean
    std = jnp.sqrt(jnp.mean(xc * xc, axis=-1, keepdims=True))
    return g * xc / (std + eps) + b


# --------------------------------------------------------------------------
# Kernels
# --------------------------------------------------------------------------
def _ln_qkv_kernel(x_ref, g_ref, b_ref, wqkv_ref, bqkv_ref,
                   q_ref, k_ref, v_ref, *, eps, d_model, compute_dtype):
    # x_ref: (tile, D) f32; wqkv_ref: (D, 3D) bf16; outputs (tile, D) bf16 each.
    x = x_ref[...].astype(jnp.float32)
    xn = _layernorm(x, g_ref[...], b_ref[...], eps).astype(compute_dtype)
    qkv = jnp.dot(xn, wqkv_ref[...],
                  preferred_element_type=jnp.float32) + bqkv_ref[...]
    q_ref[...] = qkv[:, :d_model].astype(q_ref.dtype)
    k_ref[...] = qkv[:, d_model:2 * d_model].astype(k_ref.dtype)
    v_ref[...] = qkv[:, 2 * d_model:].astype(v_ref.dtype)


def _attention_kernel(q_ref, k_ref, v_ref, m_ref, o_ref, *,
                      dk, heads_per_group, scale, compute_dtype):
    # One (batch, head-group) slab per grid step.
    # q/k/v/o blocks: (S, heads_per_group*dk) column slabs of the (B,S,D) tensors.
    # m block: (mr, S) with mr in {1, S}; 1 = keep, 0 = mask.
    q = q_ref[...]
    k = k_ref[...]
    v = v_ref[...]
    m = m_ref[...]
    outs = []
    for i in range(heads_per_group):
        sl = slice(i * dk, (i + 1) * dk)
        qh = q[:, sl].astype(compute_dtype)
        kh = k[:, sl].astype(compute_dtype)
        vh = v[:, sl].astype(compute_dtype)
        s = lax.dot_general(qh, kh, (((1,), (1,)), ((), ())),
                            preferred_element_type=jnp.float32) * scale
        s = jnp.where(m == 0.0, jnp.float32(-1e9), s)       # masked_fill semantics
        s = s - jnp.max(s, axis=-1, keepdims=True)
        e = jnp.exp(s)
        p = e / jnp.sum(e, axis=-1, keepdims=True)
        outs.append(jnp.dot(p.astype(compute_dtype), vh,
                            preferred_element_type=jnp.float32))
    o = outs[0] if heads_per_group == 1 else jnp.concatenate(outs, axis=-1)
    o_ref[...] = o.astype(o_ref.dtype)


def _proj_ln_ffn_kernel(attn_ref, x_ref, wo_ref, bo_ref, g_ref, b_ref,
                        w1_ref, b1_ref, w2_ref, b2_ref, o_ref, *,
                        eps, compute_dtype):
    # out = x_mid + W2(gelu(W1(LN2(x_mid)) + b1)) + b2
    # with x_mid = x + attn @ Wo + bo       (attention proj + residual fused in)
    a = attn_ref[...].astype(compute_dtype)
    proj = jnp.dot(a, wo_ref[...], preferred_element_type=jnp.float32) + bo_ref[...]
    x_mid = x_ref[...].astype(jnp.float32) + proj
    xn = _layernorm(x_mid, g_ref[...], b_ref[...], eps).astype(compute_dtype)
    h = jnp.dot(xn, w1_ref[...], preferred_element_type=jnp.float32) + b1_ref[...]
    h = _gelu(h).astype(compute_dtype)
    ff = jnp.dot(h, w2_ref[...], preferred_element_type=jnp.float32) + b2_ref[...]
    o_ref[...] = (x_mid + ff).astype(o_ref.dtype)


# --------------------------------------------------------------------------
# Wrapper helpers
# --------------------------------------------------------------------------
def _round_up(n, m):
    return ((n + m - 1) // m) * m


def _heads_per_group(num_heads, dk):
    # Smallest head-group whose column-slab width is a multiple of 128 lanes;
    # fall back to all heads (slab width == D, which is always lane-legal).
    for g in range(1, num_heads + 1):
        if num_heads % g == 0 and (g * dk) % 128 == 0:
            return g
    return num_heads


def _vmem_limit(blocks):
    # blocks: list of (shape, dtype). 2x for double-buffering + headroom.
    nbytes = sum(int(np.prod(s)) * np.dtype(d).itemsize for s, d in blocks)
    return int(min(max(2 * nbytes + (4 << 20), 32 << 20), 96 << 20))


# --------------------------------------------------------------------------
# Wrapper
# --------------------------------------------------------------------------
def encoder_block(x, mask, params, *, eps=1e-6, token_tile=512,
                  compute_dtype=jnp.bfloat16):
    """x: (B,S,D) f32; mask: (B,S) key-padding {0,1} or (B,S,S); → (B,S,D) f32."""
    B, S, D = x.shape
    h = params["num_heads"]
    assert D % h == 0
    dk = D // h
    d_ff = params["w1"].shape[1]
    N = B * S
    cdt = compute_dtype
    f32 = jnp.float32

    x2 = x.reshape(N, D).astype(f32)          # reshape only — no data movement

    # Token tile: multiple of 8, >= 2 grid steps when possible (v7x has 2 TCs),
    # ragged last block handled by Pallas (no jnp.pad HBM copies).
    tile = max(8, min(int(token_tile), _round_up(pl.cdiv(N, 2), 8)))
    grid_tok = (pl.cdiv(N, tile),)
    row_spec = pl.BlockSpec((tile, D), lambda i: (i, 0))

    def const_spec(shape):
        return pl.BlockSpec(shape, lambda i: (0, 0))

    # Weights bf16 (MXU-native, half the VMEM residency); biases/LN params f32.
    wqkv = jnp.concatenate([params["wq"], params["wk"], params["wv"]], axis=1).astype(cdt)
    bqkv = jnp.concatenate([params["bq"], params["bk"], params["bv"]]).reshape(1, 3 * D).astype(f32)
    ln1_g = params["ln1_g"].reshape(1, D).astype(f32)
    ln1_b = params["ln1_b"].reshape(1, D).astype(f32)
    wo = params["wo"].astype(cdt)
    bo = params["bo"].reshape(1, D).astype(f32)
    ln2_g = params["ln2_g"].reshape(1, D).astype(f32)
    ln2_b = params["ln2_b"].reshape(1, D).astype(f32)
    w1 = params["w1"].astype(cdt)
    b1 = params["b1"].reshape(1, d_ff).astype(f32)
    w2 = params["w2"].astype(cdt)
    b2 = params["b2"].reshape(1, D).astype(f32)

    # --- K1: LN1 + single wide QKV projection -------------------------------
    q, k, v = pl.pallas_call(
        functools.partial(_ln_qkv_kernel, eps=eps, d_model=D, compute_dtype=cdt),
        out_shape=tuple(jax.ShapeDtypeStruct((N, D), cdt) for _ in range(3)),
        grid_spec=pltpu.PrefetchScalarGridSpec(
            num_scalar_prefetch=0, grid=grid_tok,
            in_specs=[row_spec, const_spec((1, D)), const_spec((1, D)),
                      const_spec((D, 3 * D)), const_spec((1, 3 * D))],
            out_specs=[row_spec, row_spec, row_spec]),
        compiler_params=pltpu.CompilerParams(
            dimension_semantics=("parallel",),
            vmem_limit_bytes=_vmem_limit(
                [((tile, D), f32), ((1, D), f32), ((1, D), f32),
                 ((D, 3 * D), cdt), ((1, 3 * D), f32), ((tile, 3 * D), f32),
                 ((tile, D), cdt), ((tile, D), cdt), ((tile, D), cdt)])),
    )(x2, ln1_g, ln1_b, wqkv, bqkv)

    # --- K2: attention, one (batch, head-group) per grid step ---------------
    mask_f = mask.astype(f32)
    if mask_f.ndim == 2:                       # (B, S) key-padding mask
        mask_f = mask_f.reshape(B, 1, S)
    mr = mask_f.shape[1]                       # 1 (padding mask) or S (full mask)

    hg = _heads_per_group(h, dk)
    w = hg * dk
    n_groups = h // hg
    q3, k3, v3 = (t.reshape(B, S, D) for t in (q, k, v))   # reshape only

    head_spec = pl.BlockSpec((None, S, w), lambda b, g: (b, 0, g))
    mask_spec = pl.BlockSpec((None, mr, S), lambda b, g: (b, 0, 0))
    attn = pl.pallas_call(
        functools.partial(_attention_kernel, dk=dk, heads_per_group=hg,
                          scale=1.0 / math.sqrt(dk), compute_dtype=cdt),
        out_shape=jax.ShapeDtypeStruct((B, S, D), cdt),
        grid_spec=pltpu.PrefetchScalarGridSpec(
            num_scalar_prefetch=0, grid=(B, n_groups),
            in_specs=[head_spec, head_spec, head_spec, mask_spec],
            out_specs=head_spec),
        compiler_params=pltpu.CompilerParams(
            dimension_semantics=("parallel", "parallel"),
            vmem_limit_bytes=_vmem_limit(
                [((S, w), cdt)] * 4 + [((mr, S), f32), ((S, S), f32)])),
    )(q3, k3, v3, mask_f)

    # --- K3: output projection + residual + LN2 + FFN + residual (fused) ----
    attn2 = attn.reshape(N, D)                 # reshape only
    out = pl.pallas_call(
        functools.partial(_proj_ln_ffn_kernel, eps=eps, compute_dtype=cdt),
        out_shape=jax.ShapeDtypeStruct((N, D), f32),
        grid_spec=pltpu.PrefetchScalarGridSpec(
            num_scalar_prefetch=0, grid=grid_tok,
            in_specs=[row_spec, row_spec,
                      const_spec((D, D)), const_spec((1, D)),
                      const_spec((1, D)), const_spec((1, D)),
                      const_spec((D, d_ff)), const_spec((1, d_ff)),
                      const_spec((d_ff, D)), const_spec((1, D))],
            out_specs=row_spec),
        compiler_params=pltpu.CompilerParams(
            dimension_semantics=("parallel",),
            vmem_limit_bytes=_vmem_limit(
                [((tile, D), cdt), ((tile, D), f32),
                 ((D, D), cdt), ((1, D), f32), ((1, D), f32), ((1, D), f32),
                 ((D, d_ff), cdt), ((1, d_ff), f32), ((d_ff, D), cdt),
                 ((1, D), f32), ((tile, d_ff), f32), ((tile, D), f32)])),
    )(attn2, x2, wo, bo, ln2_g, ln2_b, w1, b1, w2, b2)

    return out.reshape(B, S, D)


# --------------------------------------------------------------------------
# Pure-JAX reference (mirrors the PyTorch module, dropout = identity).
# compute_dtype=None  → faithful f32 reference.
# compute_dtype=bf16  → mirrors the kernel's cast points (tight comparison).
# --------------------------------------------------------------------------
def encoder_block_ref(x, mask, p, *, eps=1e-6, compute_dtype=None):
    def cast(t):
        return t if compute_dtype is None else t.astype(compute_dtype)

    def mm(a, b):
        return jnp.dot(cast(a), cast(b), preferred_element_type=jnp.float32)

    def ln(t, g, b):
        mean = t.mean(-1, keepdims=True)
        std = jnp.sqrt(((t - mean) ** 2).mean(-1, keepdims=True))
        return g * (t - mean) / (std + eps) + b

    B, S, D = x.shape
    h = p["num_heads"]
    dk = D // h
    x = x.astype(jnp.float32)

    xn = ln(x, p["ln1_g"], p["ln1_b"])
    q = cast(mm(xn, p["wq"]) + p["bq"])
    k = cast(mm(xn, p["wk"]) + p["bk"])
    v = cast(mm(xn, p["wv"]) + p["bv"])

    def split(t):
        return t.reshape(B, S, h, dk).transpose(0, 2, 1, 3)

    qh, kh, vh = split(q), split(k), split(v)
    scores = jnp.einsum("bhqd,bhkd->bhqk", qh, kh,
                        preferred_element_type=jnp.float32) / math.sqrt(dk)
    m = mask[:, None, None, :] if mask.ndim == 2 else mask[:, None, :, :]
    scores = jnp.where(m == 0, jnp.float32(-1e9), scores)
    scores = scores - scores.max(-1, keepdims=True)
    e = jnp.exp(scores)
    pa = e / e.sum(-1, keepdims=True)
    attn = jnp.einsum("bhqk,bhkd->bhqd", cast(pa), vh,
                      preferred_element_type=jnp.float32)
    attn = cast(attn.transpose(0, 2, 1, 3).reshape(B, S, D))

    x_mid = x + (mm(attn, p["wo"]) + p["bo"])
    xn2 = ln(x_mid, p["ln2_g"], p["ln2_b"])
    hdn = _gelu(mm(xn2, p["w1"]) + p["b1"])
    ff = mm(hdn, p["w2"]) + p["b2"]
    return x_mid + ff


# --------------------------------------------------------------------------
if __name__ == "__main__":
    batch, seq, hidden, heads, d_ff = 2, 8, 32, 4, 64
    D = hidden

    key = jax.random.PRNGKey(0)
    keys = jax.random.split(key, 18)

    def nrm(k, shape, scale):
        return jax.random.normal(k, shape, dtype=jnp.float32) * scale

    params = {
        "num_heads": heads,
        "ln1_g": 1.0 + nrm(keys[0], (D,), 0.1),
        "ln1_b": nrm(keys[1], (D,), 0.1),
        "wq": nrm(keys[2], (D, D), 1.0 / math.sqrt(D)),
        "bq": nrm(keys[3], (D,), 0.02),
        "wk": nrm(keys[4], (D, D), 1.0 / math.sqrt(D)),
        "bk": nrm(keys[5], (D,), 0.02),
        "wv": nrm(keys[6], (D, D), 1.0 / math.sqrt(D)),
        "bv": nrm(keys[7], (D,), 0.02),
        "wo": nrm(keys[8], (D, D), 1.0 / math.sqrt(D)),
        "bo": nrm(keys[9], (D,), 0.02),
        "ln2_g": 1.0 + nrm(keys[10], (D,), 0.1),
        "ln2_b": nrm(keys[11], (D,), 0.1),
        "w1": nrm(keys[12], (D, d_ff), 1.0 / math.sqrt(D)),
        "b1": nrm(keys[13], (d_ff,), 0.02),
        "w2": nrm(keys[14], (d_ff, D), 1.0 / math.sqrt(d_ff)),
        "b2": nrm(keys[15], (D,), 0.02),
    }

    x = jax.random.normal(keys[16], (batch, seq, hidden), dtype=jnp.float32)
    # BERT-style key-padding mask: key positions >= length are masked out.
    lengths = jnp.array([seq, seq - 3], dtype=jnp.int32)
    key_mask = (jnp.arange(seq)[None, :] < lengths[:, None]).astype(jnp.float32)  # (B, S)

    out = encoder_block(x, key_mask, params)
    out = jax.block_until_ready(out)

    assert out.shape == (batch, seq, hidden)
    assert out.dtype == jnp.float32

    # Tight check vs a reference that mirrors the kernel's bf16 cast points.
    ref_matched = encoder_block_ref(x, key_mask, params, compute_dtype=jnp.bfloat16)
    err_matched = float(jnp.max(jnp.abs(out - ref_matched)))
    assert jnp.allclose(out, ref_matched, atol=2e-3, rtol=2e-3), (
        f"mismatch vs dtype-matched reference, max_err={err_matched}")

    # Loose sanity check vs the faithful f32 reference (bf16 quantization only).
    ref_f32 = encoder_block_ref(x, key_mask, params, compute_dtype=None)
    err_f32 = float(jnp.max(jnp.abs(out - ref_f32)))
    assert err_f32 < 0.25, f"drift vs f32 reference too large: {err_f32}"

    print("KERNEL_OK")
</pallas_src>

<mosaic_0001>
module attributes {stable_mosaic.version = 11 : i64} {
  func.func @_ln_qkv_kernel(%arg0: i32, %arg1: memref<8x32xf32, #tpu.memory_space<vmem>>, %arg2: memref<1x32xf32, #tpu.memory_space<vmem>>, %arg3: memref<1x32xf32, #tpu.memory_space<vmem>>, %arg4: memref<32x96xbf16, #tpu.memory_space<vmem>>, %arg5: memref<1x96xf32, #tpu.memory_space<vmem>>, %arg6: memref<8x32xbf16, #tpu.memory_space<vmem>>, %arg7: memref<8x32xbf16, #tpu.memory_space<vmem>>, %arg8: memref<8x32xbf16, #tpu.memory_space<vmem>>) attributes {dimension_semantics = [#tpu.dimension_semantics<parallel>], iteration_bounds = array<i64: 2>, scalar_prefetch = 0 : i64, scratch_operands = 0 : i64, tpu.core_type = #tpu.core_type<tc>, window_params = [{transform_indices = @transform_0, window_bounds = array<i64: 8, 32>}, {pipeline_mode = #tpu.pipeline_mode<synchronous>, transform_indices = @transform_1, window_bounds = array<i64: 1, 32>}, {pipeline_mode = #tpu.pipeline_mode<synchronous>, transform_indices = @transform_2, window_bounds = array<i64: 1, 32>}, {pipeline_mode = #tpu.pipeline_mode<synchronous>, transform_indices = @transform_3, window_bounds = array<i64: 32, 96>}, {pipeline_mode = #tpu.pipeline_mode<synchronous>, transform_indices = @transform_4, window_bounds = array<i64: 1, 96>}, {transform_indices = @transform_5, window_bounds = array<i64: 8, 32>}, {transform_indices = @transform_6, window_bounds = array<i64: 8, 32>}, {transform_indices = @transform_7, window_bounds = array<i64: 8, 32>}]} {
    %c0 = arith.constant 0 : index
    %c0_0 = arith.constant 0 : index
    %0 = vector.load %arg1[%c0, %c0_0] : memref<8x32xf32, #tpu.memory_space<vmem>>, vector<8x32xf32>
    %c0_1 = arith.constant 0 : index
    %c0_2 = arith.constant 0 : index
    %1 = vector.load %arg2[%c0_1, %c0_2] : memref<1x32xf32, #tpu.memory_space<vmem>>, vector<1x32xf32>
    %c0_3 = arith.constant 0 : index
    %c0_4 = arith.constant 0 : index
    %2 = vector.load %arg3[%c0_3, %c0_4] : memref<1x32xf32, #tpu.memory_space<vmem>>, vector<1x32xf32>
    %cst = arith.constant dense<0.000000e+00> : vector<8xf32>
    %3 = vector.multi_reduction <add>, %0, %cst [1] : vector<8x32xf32> to vector<8xf32>
    %4 = vector.shape_cast %3 : vector<8xf32> to vector<8x1xf32>
    %cst_5 = arith.constant 3.200000e+01 : f32
    %5 = vector.broadcast %cst_5 : f32 to vector<8x1xf32>
    %6 = arith.divf %4, %5 : vector<8x1xf32>
    %7 = vector.broadcast %6 : vector<8x1xf32> to vector<8x32xf32>
    %8 = arith.subf %0, %7 : vector<8x32xf32>
    %9 = arith.mulf %8, %8 : vector<8x32xf32>
    %cst_6 = arith.constant dense<0.000000e+00> : vector<8xf32>
    %10 = vector.multi_reduction <add>, %9, %cst_6 [1] : vector<8x32xf32> to vector<8xf32>
    %11 = vector.shape_cast %10 : vector<8xf32> to vector<8x1xf32>
    %cst_7 = arith.constant 3.200000e+01 : f32
    %12 = vector.broadcast %cst_7 : f32 to vector<8x1xf32>
    %13 = arith.divf %11, %12 : vector<8x1xf32>
    %14 = math.sqrt %13 : vector<8x1xf32>
    %15 = vector.broadcast %1 : vector<1x32xf32> to vector<8x32xf32>
    %16 = arith.mulf %15, %8 : vector<8x32xf32>
    %cst_8 = arith.constant 9.99999997E-7 : f32
    %17 = vector.broadcast %cst_8 : f32 to vector<8x1xf32>
    %18 = arith.addf %14, %17 : vector<8x1xf32>
    %19 = vector.broadcast %18 : vector<8x1xf32> to vector<8x32xf32>
    %20 = arith.divf %16, %19 : vector<8x32xf32>
    %21 = vector.broadcast %2 : vector<1x32xf32> to vector<8x32xf32>
    %22 = arith.addf %20, %21 : vector<8x32xf32>
    %23 = arith.truncf %22 : vector<8x32xf32> to vector<8x32xbf16>
    %c0_9 = arith.constant 0 : index
    %c0_10 = arith.constant 0 : index
    %24 = vector.load %arg4[%c0_9, %c0_10] : memref<32x96xbf16, #tpu.memory_space<vmem>>, vector<32x96xbf16>
    %cst_11 = arith.constant dense<0.000000e+00> : vector<8x96xf32>
    %25 = tpu.matmul %23, %24, %cst_11 {dimension_numbers = #tpu.dot_dimension_numbers<[1], [0], [0], [1], [0, 0, 1, 1], [], []>} : vector<8x32xbf16>, vector<32x96xbf16>, vector<8x96xf32> -> vector<8x96xf32>
    %c0_12 = arith.constant 0 : index
    %c0_13 = arith.constant 0 : index
    %26 = vector.load %arg5[%c0_12, %c0_13] : memref<1x96xf32, #tpu.memory_space<vmem>>, vector<1x96xf32>
    %27 = vector.broadcast %26 : vector<1x96xf32> to vector<8x96xf32>
    %28 = arith.addf %25, %27 : vector<8x96xf32>
    %29 = vector.extract_strided_slice %28 {offsets = [0, 0], sizes = [8, 32], strides = [1, 1]} : vector<8x96xf32> to vector<8x32xf32>
    %30 = arith.truncf %29 : vector<8x32xf32> to vector<8x32xbf16>
    %c0_14 = arith.constant 0 : index
    %c0_15 = arith.constant 0 : index
    %31 = vector.load %arg6[%c0_14, %c0_15] : memref<8x32xbf16, #tpu.memory_space<vmem>>, vector<8x32xbf16>
    tpu.vector_store %arg6[%c0_14, %c0_15], %30 {strides = array<i32>} : memref<8x32xbf16, #tpu.memory_space<vmem>>, vector<8x32xbf16>,
    %32 = vector.extract_strided_slice %28 {offsets = [0, 32], sizes = [8, 32], strides = [1, 1]} : vector<8x96xf32> to vector<8x32xf32>
    %33 = arith.truncf %32 : vector<8x32xf32> to vector<8x32xbf16>
    %c0_16 = arith.constant 0 : index
    %c0_17 = arith.constant 0 : index
    %34 = vector.load %arg7[%c0_16, %c0_17] : memref<8x32xbf16, #tpu.memory_space<vmem>>, vector<8x32xbf16>
    tpu.vector_store %arg7[%c0_16, %c0_17], %33 {strides = array<i32>} : memref<8x32xbf16, #tpu.memory_space<vmem>>, vector<8x32xbf16>,
    %35 = vector.extract_strided_slice %28 {offsets = [0, 64], sizes = [8, 32], strides = [1, 1]} : vector<8x96xf32> to vector<8x32xf32>
    %36 = arith.truncf %35 : vector<8x32xf32> to vector<8x32xbf16>
    %c0_18 = arith.constant 0 : index
    %c0_19 = arith.constant 0 : index
    %37 = vector.load %arg8[%c0_18, %c0_19] : memref<8x32xbf16, #tpu.memory_space<vmem>>, vector<8x32xbf16>
    tpu.vector_store %arg8[%c0_18, %c0_19], %36 {strides = array<i32>} : memref<8x32xbf16, #tpu.memory_space<vmem>>, vector<8x32xbf16>,
    return
  }
  func.func @transform_0(%arg0: i32) -> (i32, i32) {
    %c0_i32 = arith.constant 0 : i32
    %c0_i32_0 = arith.constant 0 : i32
    return %arg0, %c0_i32 : i32, i32
  }
  func.func @transform_1(%arg0: i32) -> (i32, i32) {
    %c0_i32 = arith.constant 0 : i32
    %c0_i32_0 = arith.constant 0 : i32
    %c0_i32_1 = arith.constant 0 : i32
    return %c0_i32, %c0_i32_0 : i32, i32
  }
  func.func @transform_2(%arg0: i32) -> (i32, i32) {
    %c0_i32 = arith.constant 0 : i32
    %c0_i32_0 = arith.constant 0 : i32
    %c0_i32_1 = arith.constant 0 : i32
    return %c0_i32, %c0_i32_0 : i32, i32
  }
  func.func @transform_3(%arg0: i32) -> (i32, i32) {
    %c0_i32 = arith.constant 0 : i32
    %c0_i32_0 = arith.constant 0 : i32
    %c0_i32_1 = arith.constant 0 : i32
    return %c0_i32, %c0_i32_0 : i32, i32
  }
  func.func @transform_4(%arg0: i32) -> (i32, i32) {
    %c0_i32 = arith.constant 0 : i32
    %c0_i32_0 = arith.constant 0 : i32
    %c0_i32_1 = arith.constant 0 : i32
    return %c0_i32, %c0_i32_0 : i32, i32
  }
  func.func @transform_5(%arg0: i32) -> (i32, i32) {
    %c0_i32 = arith.constant 0 : i32
    %c0_i32_0 = arith.constant 0 : i32
    return %arg0, %c0_i32 : i32, i32
  }
  func.func @transform_6(%arg0: i32) -> (i32, i32) {
    %c0_i32 = arith.constant 0 : i32
    %c0_i32_0 = arith.constant 0 : i32
    return %arg0, %c0_i32 : i32, i32
  }
  func.func @transform_7(%arg0: i32) -> (i32, i32) {
    %c0_i32 = arith.constant 0 : i32
    %c0_i32_0 = arith.constant 0 : i32
    return %arg0, %c0_i32 : i32, i32
  }
}

</mosaic_0001>

<llo_original>
// kernel: tpu_custom_call.1
$region0: #{tpu_custom_call.1}
  #allocation0 [shape = 'u32[]', space=smem, size = 0x4, offset = 0x4, fixed_abs, tag = 'smem constant byte address 0x4 - core index']
  #allocation1 [shape = 'u32[72,128]{1,0:T(1,128)}', space=vmem, size = 0x9000, scoped, tag = 'internal scratch']
  %s0 = inlined_call_operand.hbm [shape: f32[16,32], index: 0, kind: input, shape index: {}]
  %s1 = inlined_call_operand.hbm [shape: f32[1,32], index: 1, kind: input, shape index: {}]
  %s2 = inlined_call_operand.vmem [shape: f32[1,32], index: 2, kind: input, shape index: {}]
  %s3 = inlined_call_operand.hbm [shape: bf16[32,96], index: 3, kind: input, shape index: {}]
  %s4 = inlined_call_operand.vmem [shape: f32[1,96], index: 4, kind: input, shape index: {}]
  %s5 = inlined_call_operand.hbm [shape: bf16[16,32], index: 5, kind: output, shape index: {0}]
  %s6 = inlined_call_operand.hbm [shape: bf16[16,32], index: 6, kind: output, shape index: {1}]
  %s7 = inlined_call_operand.hbm [shape: bf16[16,32], index: 7, kind: output, shape index: {2}]
  %8 = xla_tuple %s5, %s6, %s7
  %s9 = sld [smem:[#allocation0]]
  $region81: #{tpu_custom_call.1} parent=0
    _
  %s11 = ssub.s32 1, %s9
  %s12 = scalar_select 0, %s11, %s9
  $region1: #{tpu_custom_call.1} parent=0
    #allocation2 [shape = 'u8[8192]{0}', space=vmem, size = 0x2000, scoped, tag = 'input window, operand 0']
    #allocation3 [shape = 's32[2]{0}', space=sflag, size = 0x8, scoped, tag = 'scoped memory for tpu_custom_call.1']
    #allocation4 [shape = 's32[2]{0}', space=sflag, size = 0x8, scoped, tag = 'scoped memory for tpu_custom_call.1']
    #allocation5 [shape = 'u8[512]{0}', space=vmem, size = 0x400, scoped, tag = 'input window, operand 1, single buffered']
    #allocation6 [shape = 's32[1]{0}', space=sflag, size = 0x4, scoped, tag = 'scoped memory for tpu_custom_call.1']
    #allocation7 [shape = 'u8[8192]{0}', space=vmem, size = 0x2000, scoped, tag = 'input window, operand 3, single buffered']
    #allocation8 [shape = 'u8[4096]{0}', space=vmem, size = 0x1000, scoped, tag = 'output window, operand 0']
    #allocation9 [shape = 'u8[4096]{0}', space=vmem, size = 0x1000, scoped, tag = 'output window, operand 1']
    #allocation10 [shape = 's32[2]{0}', space=sflag, size = 0x8, scoped, tag = 'scoped memory for tpu_custom_call.1']
    #allocation11 [shape = 'u8[4096]{0}', space=vmem, size = 0x1000, scoped, tag = 'output window, operand 2']
    %13 = vsyncpa [#allocation3], 0
    %s14 = scalar_lea.sflag [#allocation3], 1
    %15 = vsyncpa %s14, 0
    %16 = vsyncpa [#allocation6], 0
    %17 = vsyncpa [#allocation4], 0
    %s18 = scalar_lea.sflag [#allocation4], 1
    %19 = vsyncpa %s18, 0
    %20 = vsyncpa [#allocation10], 0
    %s21 = scalar_lea.sflag [#allocation10], 1
    %22 = vsyncpa %s21, 0
    loop: start=0, step=1, limit=4
    $region2: #{tpu_custom_call.1} parent=1 // loop_pre_header
      _
    $region3: #{tpu_custom_call.1} parent=1 // loop_header
      %s24 = sphi 0, %s28
      %p25 = scmp.ge.s32.totalorder %s24, 4
      %s34 = sphi 0, %s36
      %s37 = sphi 0, %s34
      %s38 = sphi 0, %s37
      %s54 = sphi 0, %s38
      %s58 = sphi 0, %s58
      %s60 = sphi 0, %s58
      %s61 = sphi 0, %s60
      %s75 = sphi 0, %s61
      %s79 = sphi 0, %s79
      %s81 = sphi 0, %s79
      %s82 = sphi 0, %s81
      %s96 = sphi 0, %s82
      %s100 = sphi 0, %s100
      %s102 = sphi 0, %s100
      %s103 = sphi 0, %s102
      %s117 = sphi 0, %s103
      %s121 = sphi 0, %s121
      %s123 = sphi 0, %s121
      %s124 = sphi 0, %s123
      %s138 = sphi 0, %s124
      %s144 = sphi 0, %s146
      %s147 = sphi 0, %s144
      %s148 = sphi 0, %s147
      %s164 = sphi 0, %s148
      %s170 = sphi 0, %s172
      %s173 = sphi 0, %s170
      %s174 = sphi 0, %s173
      %s190 = sphi 0, %s174
      %s196 = sphi 0, %s198
      %s199 = sphi 0, %s196
      %s200 = sphi 0, %s199
      %s216 = sphi 0, %s200
    $region4: #{tpu_custom_call.1} parent=1 // loop_header_branch
      %27 = sbr.rel (%p25) target = $region8
    $region5: #{tpu_custom_call.1} parent=1 // loop_body
      %s29 = ssub.s32 %s24, 1
      %s30 = ssub.s32 %s24, 2
      %s31 = sadd.s32 %s24, 1
      %s32 = ssub.s32 %s24, %s31
      %p33 = scmp.eq.s32.totalorder %s32, 0
      %s35 = sadd.s32 %s34, 1
      %s36 = scalar_select %p33, %s34, %s35
      %p39 = pneg %p33
      %p40 = scmp.eq.s32.totalorder %s24, 1
      %p41 = por %p39, %p40
      %p42 = scmp.ne.s32.totalorder %s34, %s37
      %p43 = scmp.eq.s32.totalorder %s24, 0
      %p44 = por %p42, %p43
      %p45 = scmp.ne.s32.totalorder %s34, %s37
      %p46 = scmp.eq.s32.totalorder %s29, 1
      %p47 = por %p45, %p46
      %p48 = scmp.ne.s32.totalorder %s37, %s38
      %p49 = scmp.eq.s32.totalorder %s29, 0
      %p50 = por %p48, %p49
      %p51 = scmp.ne.s32.totalorder %s37, %s38
      %p52 = scmp.eq.s32.totalorder %s30, 1
      %p53 = por %p51, %p52
      %p55 = scmp.ne.s32.totalorder %s38, %s54
      %p56 = scmp.eq.s32.totalorder %s30, 0
      %p57 = por %p55, %p56
      %s59 = sadd.s32 %s58, 1
      %p62 = scmp.eq.s32.totalorder %s24, 1
      %p63 = scmp.ne.s32.totalorder %s58, %s60
      %p64 = scmp.eq.s32.totalorder %s24, 0
      %p65 = por %p63, %p64
      %p66 = scmp.ne.s32.totalorder %s58, %s60
      %p67 = scmp.eq.s32.totalorder %s29, 1
      %p68 = por %p66, %p67
      %p69 = scmp.ne.s32.totalorder %s60, %s61
      %p70 = scmp.eq.s32.totalorder %s29, 0
      %p71 = por %p69, %p70
      %p72 = scmp.ne.s32.totalorder %s60, %s61
      %p73 = scmp.eq.s32.totalorder %s30, 1
      %p74 = por %p72, %p73
      %p76 = scmp.ne.s32.totalorder %s61, %s75
      %p77 = scmp.eq.s32.totalorder %s30, 0
      %p78 = por %p76, %p77
      %s80 = sadd.s32 %s79, 1
      %p83 = scmp.eq.s32.totalorder %s24, 1
      %p84 = scmp.ne.s32.totalorder %s79, %s81
      %p85 = scmp.eq.s32.totalorder %s24, 0
      %p86 = por %p84, %p85
      %p87 = scmp.ne.s32.totalorder %s79, %s81
      %p88 = scmp.eq.s32.totalorder %s29, 1
      %p89 = por %p87, %p88
      %p90 = scmp.ne.s32.totalorder %s81, %s82
      %p91 = scmp.eq.s32.totalorder %s29, 0
      %p92 = por %p90, %p91
      %p93 = scmp.ne.s32.totalorder %s81, %s82
      %p94 = scmp.eq.s32.totalorder %s30, 1
      %p95 = por %p93, %p94
      %p97 = scmp.ne.s32.totalorder %s82, %s96
      %p98 = scmp.eq.s32.totalorder %s30, 0
      %p99 = por %p97, %p98
      %s101 = sadd.s32 %s100, 1
      %p104 = scmp.eq.s32.totalorder %s24, 1
      %p105 = scmp.ne.s32.totalorder %s100, %s102
      %p106 = scmp.eq.s32.totalorder %s24, 0
      %p107 = por %p105, %p106
      %p108 = scmp.ne.s32.totalorder %s100, %s102
      %p109 = scmp.eq.s32.totalorder %s29, 1
      %p110 = por %p108, %p109
      %p111 = scmp.ne.s32.totalorder %s102, %s103
      %p112 = scmp.eq.s32.totalorder %s29, 0
      %p113 = por %p111, %p112
      %p114 = scmp.ne.s32.totalorder %s102, %s103
      %p115 = scmp.eq.s32.totalorder %s30, 1
      %p116 = por %p114, %p115
      %p118 = scmp.ne.s32.totalorder %s103, %s117
      %p119 = scmp.eq.s32.totalorder %s30, 0
      %p120 = por %p118, %p119
      %s122 = sadd.s32 %s121, 1
      %p125 = scmp.eq.s32.totalorder %s24, 1
      %p126 = scmp.ne.s32.totalorder %s121, %s123
      %p127 = scmp.eq.s32.totalorder %s24, 0
      %p128 = por %p126, %p127
      %p129 = scmp.ne.s32.totalorder %s121, %s123
      %p130 = scmp.eq.s32.totalorder %s29, 1
      %p131 = por %p129, %p130
      %p132 = scmp.ne.s32.totalorder %s123, %s124
      %p133 = scmp.eq.s32.totalorder %s29, 0
      %p134 = por %p132, %p133
      %p135 = scmp.ne.s32.totalorder %s123, %s124
      %p136 = scmp.eq.s32.totalorder %s30, 1
      %p137 = por %p135, %p136
      %p139 = scmp.ne.s32.totalorder %s124, %s138
      %p140 = scmp.eq.s32.totalorder %s30, 0
      %p141 = por %p139, %p140
      %s142 = ssub.s32 %s24, %s31
      %p143 = scmp.eq.s32.totalorder %s142, 0
      %s145 = sadd.s32 %s144, 1
      %s146 = scalar_select %p143, %s144, %s145
      %p149 = pneg %p143
      %p150 = scmp.eq.s32.totalorder %s24, 1
      %p151 = por %p149, %p150
      %p152 = scmp.ne.s32.totalorder %s144, %s147
      %p153 = scmp.eq.s32.totalorder %s24, 0
      %p154 = por %p152, %p153
      %p155 = scmp.ne.s32.totalorder %s144, %s147
      %p156 = scmp.eq.s32.totalorder %s29, 1
      %p157 = por %p155, %p156
      %p158 = scmp.ne.s32.totalorder %s147, %s148
      %p159 = scmp.eq.s32.totalorder %s29, 0
      %p160 = por %p158, %p159
      %p161 = scmp.ne.s32.totalorder %s147, %s148
      %p162 = scmp.eq.s32.totalorder %s30, 1
      %p163 = por %p161, %p162
      %p165 = scmp.ne.s32.totalorder %s148, %s164
      %p166 = scmp.eq.s32.totalorder %s30, 0
      %p167 = por %p165, %p166
      %s168 = ssub.s32 %s24, %s31
      %p169 = scmp.eq.s32.totalorder %s168, 0
      %s171 = sadd.s32 %s170, 1
      %s172 = scalar_select %p169, %s170, %s171
      %p175 = pneg %p169
      %p176 = scmp.eq.s32.totalorder %s24, 1
      %p177 = por %p175, %p176
      %p178 = scmp.ne.s32.totalorder %s170, %s173
      %p179 = scmp.eq.s32.totalorder %s24, 0
      %p180 = por %p178, %p179
      %p181 = scmp.ne.s32.totalorder %s170, %s173
      %p182 = scmp.eq.s32.totalorder %s29, 1
      %p183 = por %p181, %p182
      %p184 = scmp.ne.s32.totalorder %s173, %s174
      %p185 = scmp.eq.s32.totalorder %s29, 0
      %p186 = por %p184, %p185
      %p187 = scmp.ne.s32.totalorder %s173, %s174
      %p188 = scmp.eq.s32.totalorder %s30, 1
      %p189 = por %p187, %p188
      %p191 = scmp.ne.s32.totalorder %s174, %s190
      %p192 = scmp.eq.s32.totalorder %s30, 0
      %p193 = por %p191, %p192
      %s194 = ssub.s32 %s24, %s31
      %p195 = scmp.eq.s32.totalorder %s194, 0
      %s197 = sadd.s32 %s196, 1
      %s198 = scalar_select %p195, %s196, %s197
      %p201 = pneg %p195
      %p202 = scmp.eq.s32.totalorder %s24, 1
      %p203 = por %p201, %p202
      %p204 = scmp.ne.s32.totalorder %s196, %s199
      %p205 = scmp.eq.s32.totalorder %s24, 0
      %p206 = por %p204, %p205
      %p207 = scmp.ne.s32.totalorder %s196, %s199
      %p208 = scmp.eq.s32.totalorder %s29, 1
      %p209 = por %p207, %p208
      %p210 = scmp.ne.s32.totalorder %s199, %s200
      %p211 = scmp.eq.s32.totalorder %s29, 0
      %p212 = por %p210, %p211
      %p213 = scmp.ne.s32.totalorder %s199, %s200
      %p214 = scmp.eq.s32.totalorder %s30, 1
      %p215 = por %p213, %p214
      %p217 = scmp.ne.s32.totalorder %s200, %s216
      %p218 = scmp.eq.s32.totalorder %s30, 0
      %p219 = por %p217, %p218
      %p220 = scmp.le.s32.totalorder 1, %s24
      %p221 = scmp.lt.s32.totalorder %s24, 3
      %p222 = pnand %p220, %p221
      %p223 = pneg %p222
      // Predicated region
      $region9: #{tpu_custom_call.1} parent=5 // pred_check
        _
      $region10: #{tpu_custom_call.1} parent=5 // pred_check_branch
        %225 = sbr.rel (%p222) target = $region12
      $region11: #{tpu_custom_call.1} parent=5 // pred_region
        %s226 = ssub.s32 %s24, 1
        // Predicated region
        $region13: #{tpu_custom_call.1} parent=11 // pred_check
          %p227 = pneg %p71
        $region14: #{tpu_custom_call.1} parent=11 // pred_check_branch
          %229 = sbr.rel (%p227) target = $region16
        $region15: #{tpu_custom_call.1} parent=11 // pred_region
          %231 = vsyncadd [#allocation6], 0
          %s233 = sshll.u32 %s1, 4
          %s234 = int_to_ptr.hbm [resolvable:$true] %s233
          %s235 = sshll.u32 [#allocation5], 4
          %s236 = int_to_ptr.vmem [resolvable:$true] %s235
          %238 = dma.hbm_to_vmem [thread:$0]  %s234, 16, %s236, [#allocation6]
        $region16: #{tpu_custom_call.1} parent=11 // pred_fallthru
          _
        // Predicated region
        $region17: #{tpu_custom_call.1} parent=11 // pred_check
          %p239 = pneg %p92
        $region18: #{tpu_custom_call.1} parent=11 // pred_check_branch
          %241 = sbr.rel (%p239) target = $region20
        $region19: #{tpu_custom_call.1} parent=11 // pred_region
          _
        $region20: #{tpu_custom_call.1} parent=11 // pred_fallthru
          _
        // Predicated region
        $region21: #{tpu_custom_call.1} parent=11 // pred_check
          %p242 = pneg %p113
        $region22: #{tpu_custom_call.1} parent=11 // pred_check_branch
          %244 = sbr.rel (%p242) target = $region24
        $region23: #{tpu_custom_call.1} parent=11 // pred_region
          %246 = vsyncadd [#allocation6], 0
          %s247 = sshll.u32 %s3, 4
          %s248 = int_to_ptr.hbm [resolvable:$true] %s247
          %s249 = sshll.u32 [#allocation7], 4
          %s250 = int_to_ptr.vmem [resolvable:$true] %s249
          %255 = dma.hbm_to_vmem [thread:$0]  %s248, 256, %s250, [#allocation6], 64, 64, 4
        $region24: #{tpu_custom_call.1} parent=11 // pred_fallthru
          _
        // Predicated region
        $region25: #{tpu_custom_call.1} parent=11 // pred_check
          %p256 = pneg %p134
        $region26: #{tpu_custom_call.1} parent=11 // pred_check_branch
          %258 = sbr.rel (%p256) target = $region28
        $region27: #{tpu_custom_call.1} parent=11 // pred_region
          _
        $region28: #{tpu_custom_call.1} parent=11 // pred_fallthru
          _
      $region12: #{tpu_custom_call.1} parent=5 // pred_fallthru
        _
      %p259 = scmp.lt.s32.totalorder %s24, 2
      // Predicated region
      $region29: #{tpu_custom_call.1} parent=5 // pred_check
        %p260 = pneg %p259
      $region30: #{tpu_custom_call.1} parent=5 // pred_check_branch
        %262 = sbr.rel (%p260) target = $region32
      $region31: #{tpu_custom_call.1} parent=5 // pred_region
        // Predicated region
        $region33: #{tpu_custom_call.1} parent=31 // pred_check
          %p263 = pneg %p44
        $region34: #{tpu_custom_call.1} parent=31 // pred_check_branch
          %265 = sbr.rel (%p263) target = $region36
        $region35: #{tpu_custom_call.1} parent=31 // pred_region
          %s266 = sand.u32 %s34, 1
          %s267 = scalar_lea.sflag [#allocation3], %s266
          %s268 = sand.u32 %s34, 1
          %s269 = smul.addr %s268, 8
          %s270 = scalar_lea.vmem [#allocation2], %s269
          %272 = vsyncadd %s267, 0
          %s273 = smul.addr %s24, 8
          %s274 = scalar_lea.hbm %s0, %s273
          %s276 = sshll.u32 %s274, 4
          %s277 = int_to_ptr.hbm [resolvable:$true] %s276
          %s278 = sshll.u32 %s270, 4
          %s279 = int_to_ptr.vmem [resolvable:$true] %s278
          %281 = dma.hbm_to_vmem [thread:$0]  %s277, 128, %s279, %s267
        $region36: #{tpu_custom_call.1} parent=31 // pred_fallthru
          _
      $region32: #{tpu_custom_call.1} parent=5 // pred_fallthru
        _
      %p282 = scmp.le.s32.totalorder 1, %s24
      %p283 = scmp.lt.s32.totalorder %s24, 3
      %p284 = pnand %p282, %p283
      %p285 = pneg %p284
      // Predicated region
      $region37: #{tpu_custom_call.1} parent=5 // pred_check
        _
      $region38: #{tpu_custom_call.1} parent=5 // pred_check_branch
        %287 = sbr.rel (%p284) target = $region40
      $region39: #{tpu_custom_call.1} parent=5 // pred_region
        %s288 = ssub.s32 %s24, 1
        %s289 = sand.u32 %s37, 1
        %s290 = scalar_lea.sflag [#allocation3], %s289
        %s291 = sand.u32 %s37, 1
        %s292 = smul.addr %s291, 8
        %s293 = scalar_lea.vmem [#allocation2], %s292
        // Predicated region
        $region41: #{tpu_custom_call.1} parent=39 // pred_check
          %p294 = pneg %p50
        $region42: #{tpu_custom_call.1} parent=39 // pred_check_branch
          %296 = sbr.rel (%p294) target = $region44
        $region43: #{tpu_custom_call.1} parent=39 // pred_region
          %298 = dma.done %s290, 128
        $region44: #{tpu_custom_call.1} parent=39 // pred_fallthru
          _
        // Predicated region
        $region45: #{tpu_custom_call.1} parent=39 // pred_check
          %p299 = pneg %p71
        $region46: #{tpu_custom_call.1} parent=39 // pred_check_branch
          %301 = sbr.rel (%p299) target = $region48
        $region47: #{tpu_custom_call.1} parent=39 // pred_region
          %303 = dma.done [#allocation6], 16
        $region48: #{tpu_custom_call.1} parent=39 // pred_fallthru
          _
        // Predicated region
        $region49: #{tpu_custom_call.1} parent=39 // pred_check
          %p304 = pneg %p113
        $region50: #{tpu_custom_call.1} parent=39 // pred_check_branch
          %306 = sbr.rel (%p304) target = $region52
        $region51: #{tpu_custom_call.1} parent=39 // pred_region
          %308 = dma.done [#allocation6], 256
        $region52: #{tpu_custom_call.1} parent=39 // pred_fallthru
          _
        %s309 = sand.u32 %s37, 1
        %s310 = scalar_lea.sflag [#allocation3], %s309
        %s311 = sand.u32 %s37, 1
        %s312 = smul.addr %s311, 8
        %s313 = scalar_lea.vmem [#allocation2], %s312
        %p314 = pneg %p50
        %p315 = pneg %p47
        %p316 = pneg %p71
        %p317 = pneg %p68
        %p318 = pneg %p92
        %p319 = pneg %p89
        %p320 = pneg %p113
        %p321 = pneg %p110
        %p322 = pneg %p134
        %p323 = pneg %p131
        %p324 = pneg %p160
        %p325 = pneg %p157
        %s326 = sand.u32 %s147, 1
        %s327 = scalar_lea.sflag [#allocation4], %s326
        %s328 = sand.u32 %s147, 1
        %s329 = smul.addr %s328, 4
        %s330 = scalar_lea.vmem [#allocation8], %s329
        %p331 = pneg %p186
        %p332 = pneg %p183
        %s333 = sand.u32 %s29, 1
        %s334 = scalar_lea.sflag [#allocation10], %s333
        %s335 = sand.u32 %s173, 1
        %s336 = smul.addr %s335, 4
        %s337 = scalar_lea.vmem [#allocation9], %s336
        %p338 = pneg %p212
        %p339 = pneg %p209
        %s340 = sand.u32 %s29, 1
        %s341 = scalar_lea.sflag [#allocation10], %s340
        %s342 = sand.u32 %s199, 1
        %s343 = smul.addr %s342, 4
        %s344 = scalar_lea.vmem [#allocation11], %s343
        %v346 = vld [vmem:[%s293] sm:$0xff]
        %v347 = vld [vmem:[#allocation5] sm:$0x1]
        %v348 = vld [vmem:[%s2] sm:$0x1]
        %vm349 = vcmask 261120
        %v350 = vsel %vm349, %v346, 0.0
        %351 = vadd.xlane.f32.xlu0 %v350
        %v352 = vpop.xlane.xlu0 %351
        %v353 = vrcp.pop 32.0
        %v354 = vmul.f32 32.0, %v353
        %v355 = vsub.f32 1.0, %v354
        %v356 = vmul.f32 %v353, %v355
        %v357 = vadd.f32 %v353, %v356
        %vm358 = vweird.f32 %v353
        %v359 = vsel %vm358, %v353, %v357
        %v360 = vmul.f32 %v352, %v359
        %v361 = vsub.f32 %v346, %v360
        %v362 = vmul.f32 %v361, %v361
        %v363 = vsel %vm349, %v362, 0.0
        %364 = vadd.xlane.f32.xlu0 %v363
        %v365 = vpop.xlane.xlu0 %364
        %v366 = vmul.f32 %v365, %v359
        %v367 = vrsqrt.pop %v366
        %v368 = vmul.f32 %v367, %v366
        %v369 = vmul.f32 %v368, %v367
        %v370 = vmul.f32 0.5, %v369
        %v371 = vsub.f32 1.5, %v370
        %v372 = vmul.f32 %v367, %v371
        %v373 = vmul.f32 %v366, %v372
        %vm374 = vcmp.eq.f32.partialorder %v366, inf
        %v375 = vsel %vm374, %v366, %v373
        %vm376 = vcmp.eq.f32.partialorder %v366, 0.0
        %v377 = vand.u32 %v366, 2147483648
        %v378 = vsel %vm376, %v377, %v375
        %v380 = vperm.slane %v347, 0
        %v382 = vmul.f32 %v380, %v361
        %v383 = vadd.f32 %v378, 1e-06
        %v384 = vrcp.pop %v383
        %v385 = vmul.f32 %v383, %v384
        %v386 = vsub.f32 1.0, %v385
        %v387 = vmul.f32 %v384, %v386
        %v388 = vadd.f32 %v384, %v387
        %vm389 = vweird.f32 %v383
        %vm390 = vweird.f32 %v384
        %vm391 = vmor %vm389, %vm390
        %v392 = vsel %vm391, %v384, %v388
        %v393 = vand.u32 2147483647, %v383
        %vm394 = vcmp.eq.f32.partialorder %v393, 8.507059e+37
        %v395 = vand.u32 %v383, 2147483648
        %v396 = vor.u32 1.1754944e-38, %v395
        %v397 = vsel %vm394, %v396, %v392
        %v398 = vmul.f32 %v382, %v397
        %v400 = vperm.slane %v348, 0
        %v402 = vadd.f32 %v398, %v400
        %v403 = vpack.c.bf16 %v402, %v402
        %v404 = vld [vmem:[#allocation7] sm:$0xf]
        %v405 = vld [vmem:[#allocation7 + $0x4] sm:$0xf]
        %v406 = vld [vmem:[#allocation7 + $0x8] sm:$0xf]
        %v407 = vld [vmem:[#allocation7 + $0xc] sm:$0xf]
        %v408 = vld [vmem:[%s4] sm:$0x1]
        %v410 = vperm.slane %v408, 0
        %v416 = vunpack.c.l.b16 %v404
        %v417 = vunpack.c.l.b16 %v405
        %v418 = vunpack.c.l.b16 %v406
        %v419 = vunpack.c.l.b16 %v407
        %v420 = vpack.c.b16 %v417, %v416
        %v421 = vpack.c.b16 %v419, %v418
        %v425 = vsel %vm349, %v403, 0
        %427 = vmatpush.bf16.msra.mxu0 0
        %428 = vmatpush.bf16.msra.mxu0 0
        %429 = vmatpush.bf16.msra.mxu0 0
        %430 = vmatpush.bf16.msra.mxu0 0
        %431 = vmatpush.bf16.msra.mxu0 0
        %432 = vmatpush.bf16.msra.mxu0 0
        %433 = vmatpush.bf16.msra.mxu0 %v421
        %434 = vmatpush.bf16.msra.mxu0 %v420
        %435 = vmatmul.bf16.gmra.mxu0 %v425
        %v436 = vpop.f32.mrf.mxu0
        %v437 = vadd.f32 %v410, %v436
        %v438 = vpop.f32.mrf.mxu0
        %439 = vdwg.mxu0
        %v440 = vpack.c.bf16 %v437, %v437
        %vm441 = vcmask 257024
        %442 = vst.msk [vmem:[%s330] sm:$0xf] %vm441, %v440
        %444 = vrot.lane.b32.xlu0 %v440, 96
        %v445 = vpop.permute.xlu0 %444
        %447 = vst.msk [vmem:[%s337] sm:$0xf] %vm441, %v445
        %448 = vrot.lane.b32.xlu0 %v440, 64
        %v449 = vpop.permute.xlu0 %448
        %451 = vst.msk [vmem:[%s344] sm:$0xf] %vm441, %v449
        %s452 = sand.u32 %s147, 1
        %s453 = scalar_lea.sflag [#allocation4], %s452
        %s454 = sand.u32 %s147, 1
        %s455 = smul.addr %s454, 4
        %s456 = scalar_lea.vmem [#allocation8], %s455
        %s457 = sand.u32 %s29, 1
        %s458 = scalar_lea.sflag [#allocation10], %s457
        %s459 = sand.u32 %s173, 1
        %s460 = smul.addr %s459, 4
        %s461 = scalar_lea.vmem [#allocation9], %s460
        %s462 = sand.u32 %s29, 1
        %s463 = scalar_lea.sflag [#allocation10], %s462
        %s464 = sand.u32 %s199, 1
        %s465 = smul.addr %s464, 4
        %s466 = scalar_lea.vmem [#allocation11], %s465
        // Predicated region
        $region53: #{tpu_custom_call.1} parent=39 // pred_check
          %p467 = pneg %p157
        $region54: #{tpu_custom_call.1} parent=39 // pred_check_branch
          %469 = sbr.rel (%p467) target = $region56
        $region55: #{tpu_custom_call.1} parent=39 // pred_region
          %471 = vsyncadd %s453, 0
          %s472 = smul.addr %s29, 4
          %s473 = scalar_lea.hbm %s5, %s472
          %s475 = sshll.u32 %s456, 4
          %s476 = int_to_ptr.vmem [resolvable:$true] %s475
          %s477 = sshll.u32 %s473, 4
          %s478 = int_to_ptr.hbm [resolvable:$true] %s477
          %480 = dma.vmem_to_hbm [thread:$0]  %s476, 64, %s478, %s453
        $region56: #{tpu_custom_call.1} parent=39 // pred_fallthru
          _
        // Predicated region
        $region57: #{tpu_custom_call.1} parent=39 // pred_check
          %p481 = pneg %p183
        $region58: #{tpu_custom_call.1} parent=39 // pred_check_branch
          %483 = sbr.rel (%p481) target = $region60
        $region59: #{tpu_custom_call.1} parent=39 // pred_region
          %485 = vsyncadd %s458, 0
          %s486 = smul.addr %s29, 4
          %s487 = scalar_lea.hbm %s6, %s486
          %s489 = sshll.u32 %s461, 4
          %s490 = int_to_ptr.vmem [resolvable:$true] %s489
          %s491 = sshll.u32 %s487, 4
          %s492 = int_to_ptr.hbm [resolvable:$true] %s491
          %494 = dma.vmem_to_hbm [thread:$0]  %s490, 64, %s492, %s458
        $region60: #{tpu_custom_call.1} parent=39 // pred_fallthru
          _
        // Predicated region
        $region61: #{tpu_custom_call.1} parent=39 // pred_check
          %p495 = pneg %p209
        $region62: #{tpu_custom_call.1} parent=39 // pred_check_branch
          %497 = sbr.rel (%p495) target = $region64
        $region63: #{tpu_custom_call.1} parent=39 // pred_region
          %499 = vsyncadd %s463, 0
          %s500 = smul.addr %s29, 4
          %s501 = scalar_lea.hbm %s7, %s500
          %s503 = sshll.u32 %s466, 4
          %s504 = int_to_ptr.vmem [resolvable:$true] %s503
          %s505 = sshll.u32 %s501, 4
          %s506 = int_to_ptr.hbm [resolvable:$true] %s505
          %508 = dma.vmem_to_hbm [thread:$0]  %s504, 64, %s506, %s463
        $region64: #{tpu_custom_call.1} parent=39 // pred_fallthru
          _
      $region40: #{tpu_custom_call.1} parent=5 // pred_fallthru
        _
      %p509 = scmp.le.s32.totalorder 2, %s24
      // Predicated region
      $region65: #{tpu_custom_call.1} parent=5 // pred_check
        %p510 = pneg %p509
      $region66: #{tpu_custom_call.1} parent=5 // pred_check_branch
        %512 = sbr.rel (%p510) target = $region68
      $region67: #{tpu_custom_call.1} parent=5 // pred_region
        %s513 = ssub.s32 %s24, 2
        // Predicated region
        $region69: #{tpu_custom_call.1} parent=67 // pred_check
          %p514 = pneg %p163
        $region70: #{tpu_custom_call.1} parent=67 // pred_check_branch
          %516 = sbr.rel (%p514) target = $region72
        $region71: #{tpu_custom_call.1} parent=67 // pred_region
          %s517 = sand.u32 %s148, 1
          %s518 = scalar_lea.sflag [#allocation4], %s517
          %s519 = sand.u32 %s148, 1
          %s520 = smul.addr %s519, 4
          %s521 = scalar_lea.vmem [#allocation8], %s520
          %523 = dma.done %s518, 64
        $region72: #{tpu_custom_call.1} parent=67 // pred_fallthru
          _
        // Predicated region
        $region73: #{tpu_custom_call.1} parent=67 // pred_check
          %p524 = pneg %p189
        $region74: #{tpu_custom_call.1} parent=67 // pred_check_branch
          %526 = sbr.rel (%p524) target = $region76
        $region75: #{tpu_custom_call.1} parent=67 // pred_region
          %s527 = sand.u32 %s30, 1
          %s528 = scalar_lea.sflag [#allocation10], %s527
          %s529 = sand.u32 %s174, 1
          %s530 = smul.addr %s529, 4
          %s531 = scalar_lea.vmem [#allocation9], %s530
          %533 = dma.done %s528, 64
        $region76: #{tpu_custom_call.1} parent=67 // pred_fallthru
          _
        // Predicated region
        $region77: #{tpu_custom_call.1} parent=67 // pred_check
          %p534 = pneg %p215
        $region78: #{tpu_custom_call.1} parent=67 // pred_check_branch
          %536 = sbr.rel (%p534) target = $region80
        $region79: #{tpu_custom_call.1} parent=67 // pred_region
          %s537 = sand.u32 %s30, 1
          %s538 = scalar_lea.sflag [#allocation10], %s537
          %s539 = sand.u32 %s200, 1
          %s540 = smul.addr %s539, 4
          %s541 = scalar_lea.vmem [#allocation11], %s540
          %543 = dma.done %s538, 64
        $region80: #{tpu_custom_call.1} parent=67 // pred_fallthru
          _
      $region68: #{tpu_custom_call.1} parent=5 // pred_fallthru
        _
    $region6: #{tpu_custom_call.1} parent=1 // loop_footer
      %s28 = sadd.s32 1, %s24
    $region7: #{tpu_custom_call.1} parent=1 // loop_footer_branch
      %23 = sbr.rel target = $region3
    $region8: #{tpu_custom_call.1} parent=1 // loop_exit
      _
    %544 = vsyncpa [#allocation3], 1
    %s545 = scalar_lea.sflag [#allocation3], 1
    %546 = vsyncpa %s545, 1
    %547 = vsyncpa [#allocation6], 1
    %548 = vsyncpa [#allocation4], 1
    %s549 = scalar_lea.sflag [#allocation4], 1
    %550 = vsyncpa %s549, 1
    %551 = vsyncpa [#allocation10], 1
    %s552 = scalar_lea.sflag [#allocation10], 1
    %553 = vsyncpa %s552, 1

</llo_original>
